<compile_context>
chip_gen: v6e
topology: v6e:2x2x1
jax: 0.10.0
libtpu: 0.0.40
codegen_flags: <defaults>
</compile_context>

<pallas_src>
import jax
import jax.numpy as jnp
import numpy as np
from jax import lax
from jax.experimental import pallas as pl
from jax.experimental.pallas import tpu as pltpu

EPS = 1e-5  # nn.BatchNorm2d default eps


def _pick_tile_hw(hw, bytes_per_col, budget=8 * 1024 * 1024):
    """Largest tile along the flattened-spatial (lane) axis whose double-buffered
    blocks stay well below every generation's default scoped-VMEM limit
    (16 MiB v5e, 32 MiB v6e/v7x).  Halving keeps the tile a divisor of hw and a
    multiple of 128 (or the full extent when hw itself is small)."""
    tile = hw
    while tile % 256 == 0 and 2 * tile * bytes_per_col > budget:
        tile //= 2
    return tile


@jax.jit
def unet_up_forward(x, skip_input, weight, gamma, beta):
    """Forward pass of UNetUp (dropout=0.0). x, skip_input are NCHW float32.

    weight: ConvTranspose2d weight (C_in, C_out, 4, 4); gamma/beta: (C_out,).
    """
    # TODO(synk): nn.Dropout branch omitted (module default dropout=0.0); a
    # nonzero dropout would use pltpu.prng_seed/prng_random_bits in-kernel.
    N, C_in, H, W = x.shape
    C_out = weight.shape[1]
    Ho, Wo = 2 * H, 2 * W
    HW = Ho * Wo
    K = C_in * 16
    M = N * HW  # reduction size of BatchNorm2d batch statistics

    # ---- glue: transposed conv -> zero-dilated input, channel-major im2col ----
    xb = x.astype(jnp.bfloat16)
    xd = jnp.zeros((N, C_in, Ho + 3, Wo + 3), dtype=jnp.bfloat16)
    xd = xd.at[:, :, 2:2 + Ho - 1:2, 2:2 + Wo - 1:2].set(xb)
    slabs = [xd[:, :, kh:kh + Ho, kw:kw + Wo] for kh in range(4) for kw in range(4)]
    patches = jnp.stack(slabs, axis=2).reshape(N, K, HW)          # (N, K, Ho*Wo) bf16

    # Equivalent regular-conv weight, channel-major:
    #   Wt[co, (ci,kh,kw)] = W[ci, co, 3-kh, 3-kw]
    w_t = weight[:, :, ::-1, ::-1].transpose(1, 0, 2, 3).reshape(C_out, K)
    w_t = w_t.astype(jnp.bfloat16)

    skip_cm = skip_input.astype(jnp.float32).reshape(N, C_out, HW)

    # ---- Pallas kernel 1: conv-as-matmul (lane-dense) + per-tile BN partial sums
    tile1 = _pick_tile_hw(HW, 2 * K + 4 * C_out)
    n_t1 = HW // tile1

    def conv_kernel(w_ref, p_ref, y_ref, stat_ref):
        # (C_out, K) @ (K, tile1) on the MXU, f32 accumulation.
        y = jnp.dot(w_ref[...], p_ref[0], preferred_element_type=jnp.float32)
        y_ref[0] = y
        # Per-tile partial sums for the BatchNorm batch statistics.
        stat_ref[0, 0, :, 0:1] = jnp.sum(y, axis=1, keepdims=True)
        stat_ref[0, 0, :, 1:2] = jnp.sum(y * y, axis=1, keepdims=True)

    y_cm, stats = pl.pallas_call(
        conv_kernel,
        out_shape=(
            jax.ShapeDtypeStruct((N, C_out, HW), jnp.float32),
            jax.ShapeDtypeStruct((N, n_t1, C_out, 2), jnp.float32),
        ),
        grid=(N, n_t1),
        in_specs=[
            pl.BlockSpec((C_out, K), lambda n, t: (0, 0)),
            pl.BlockSpec((1, K, tile1), lambda n, t: (n, 0, t)),
        ],
        out_specs=(
            pl.BlockSpec((1, C_out, tile1), lambda n, t: (n, 0, t)),
            pl.BlockSpec((1, 1, C_out, 2), lambda n, t: (n, t, 0, 0)),
        ),
        compiler_params=pltpu.CompilerParams(
            dimension_semantics=("parallel", "parallel")),
    )(w_t, patches)

    # ---- glue: finalize batch statistics -> fused scale/shift (tiny) ----
    tot = jnp.sum(stats, axis=(0, 1))                    # (C_out, 2)
    mean = tot[:, 0] / M
    var = jnp.maximum(tot[:, 1] / M - mean * mean, 0.0)  # guard tiny negatives
    scale = gamma.astype(jnp.float32) * lax.rsqrt(var + EPS)
    shift = beta.astype(jnp.float32) - mean * scale
    scale_shift = jnp.stack([scale, shift], axis=1)      # (C_out, 2)

    # ---- Pallas kernel 2: BN (batch stats) + ReLU + concat with skip ----
    tile2 = _pick_tile_hw(HW, 16 * C_out)
    n_t2 = HW // tile2

    def bn_relu_cat_kernel(ss_ref, y_ref, skip_ref, o_ref):
        sc = ss_ref[:, 0:1]                              # (C_out, 1)
        sh = ss_ref[:, 1:2]
        o_ref[0, :C_out, :] = jnp.maximum(y_ref[0] * sc + sh, 0.0)
        o_ref[0, C_out:, :] = skip_ref[0]                # folded torch.cat(..., 1)

    out_flat = pl.pallas_call(
        bn_relu_cat_kernel,
        out_shape=jax.ShapeDtypeStruct((N, 2 * C_out, HW), jnp.float32),
        grid=(N, n_t2),
        in_specs=[
            pl.BlockSpec((C_out, 2), lambda n, t: (0, 0)),
            pl.BlockSpec((1, C_out, tile2), lambda n, t: (n, 0, t)),
            pl.BlockSpec((1, C_out, tile2), lambda n, t: (n, 0, t)),
        ],
        out_specs=pl.BlockSpec((1, 2 * C_out, tile2), lambda n, t: (n, 0, t)),
        compiler_params=pltpu.CompilerParams(
            dimension_semantics=("parallel", "parallel")),
    )(scale_shift, y_cm, skip_cm)

    # Channel-major flat layout -> NCHW is a free reshape (no transpose/concat).
    return out_flat.reshape(N, 2 * C_out, Ho, Wo)


def _reference(x, skip, weight, gamma, beta):
    # Pure-JAX f32 reference of the PyTorch forward (training-mode BN batch stats).
    w_conv = jnp.transpose(weight[:, :, ::-1, ::-1], (1, 0, 2, 3))  # (C_out,C_in,4,4)
    y = lax.conv_general_dilated(
        x, w_conv, window_strides=(1, 1), padding=((2, 2), (2, 2)),
        lhs_dilation=(2, 2), dimension_numbers=("NCHW", "OIHW", "NCHW"))
    mean = y.mean(axis=(0, 2, 3), keepdims=True)
    var = y.var(axis=(0, 2, 3), keepdims=True)
    y = (y - mean) * lax.rsqrt(var + EPS) * gamma.reshape(1, -1, 1, 1) \
        + beta.reshape(1, -1, 1, 1)
    y = jnp.maximum(y, 0.0)
    return jnp.concatenate([y, skip], axis=1)


if __name__ == "__main__":
    key = jax.random.PRNGKey(0)
    k1, k2, k3, k4, k5 = jax.random.split(key, 5)

    N, C_in, H, W = 2, 4, 16, 16
    C_out = 8  # UNetUp(in_size=4, out_size=8)

    x = jax.random.normal(k1, (N, C_in, H, W), dtype=jnp.float32)
    skip = jax.random.normal(k2, (N, C_out, 2 * H, 2 * W), dtype=jnp.float32)
    # ConvTranspose2d weight shape: (in_size, out_size, 4, 4), bias=False
    weight = 0.1 * jax.random.normal(k3, (C_in, C_out, 4, 4), dtype=jnp.float32)
    gamma = 1.0 + 0.1 * jax.random.normal(k4, (C_out,), dtype=jnp.float32)
    beta = 0.1 * jax.random.normal(k5, (C_out,), dtype=jnp.float32)

    out = unet_up_forward(x, skip, weight, gamma, beta)
    out = jax.block_until_ready(out)
    assert out.shape == (N, 2 * C_out, 2 * H, 2 * W)

    # Tolerance is loosened vs. the pure-f32 reference because the conv matmul
    # runs with bf16 MXU inputs (f32 accumulation); indexing/weight-flip bugs
    # would produce O(1) errors after BatchNorm and are still caught.
    ref = _reference(x, skip, weight, gamma, beta)
    np.testing.assert_allclose(np.asarray(out), np.asarray(ref), rtol=3e-2, atol=3e-2)

    print("KERNEL_OK")
</pallas_src>

<mosaic_0001>
module attributes {stable_mosaic.version = 11 : i64} {
  func.func @conv_kernel(%arg0: i32, %arg1: i32, %arg2: memref<8x64xbf16, #tpu.memory_space<vmem>>, %arg3: memref<1x64x1024xbf16, #tpu.memory_space<vmem>>, %arg4: memref<1x8x1024xf32, #tpu.memory_space<vmem>>, %arg5: memref<1x1x8x2xf32, #tpu.memory_space<vmem>>) attributes {dimension_semantics = [#tpu.dimension_semantics<parallel>, #tpu.dimension_semantics<parallel>], iteration_bounds = array<i64: 2, 1>, scalar_prefetch = 0 : i64, scratch_operands = 0 : i64, tpu.core_type = #tpu.core_type<tc>, window_params = [{pipeline_mode = #tpu.pipeline_mode<synchronous>, transform_indices = @transform_0, window_bounds = array<i64: 8, 64>}, {transform_indices = @transform_1, window_bounds = array<i64: 1, 64, 1024>}, {transform_indices = @transform_2, window_bounds = array<i64: 1, 8, 1024>}, {transform_indices = @transform_3, window_bounds = array<i64: 1, 1, 8, 2>}]} {
    %c0 = arith.constant 0 : index
    %c0_0 = arith.constant 0 : index
    %0 = vector.load %arg2[%c0, %c0_0] : memref<8x64xbf16, #tpu.memory_space<vmem>>, vector<8x64xbf16>
    %c0_1 = arith.constant 0 : index
    %c0_2 = arith.constant 0 : index
    %c0_3 = arith.constant 0 : index
    %1 = vector.load %arg3[%c0_1, %c0_2, %c0_3] : memref<1x64x1024xbf16, #tpu.memory_space<vmem>>, vector<1x64x1024xbf16>
    %2 = vector.shape_cast %1 : vector<1x64x1024xbf16> to vector<64x1024xbf16>
    %cst = arith.constant dense<0.000000e+00> : vector<8x1024xf32>
    %3 = tpu.matmul %0, %2, %cst {dimension_numbers = #tpu.dot_dimension_numbers<[1], [0], [0], [1], [0, 0, 1, 1], [], []>} : vector<8x64xbf16>, vector<64x1024xbf16>, vector<8x1024xf32> -> vector<8x1024xf32>
    %c0_4 = arith.constant 0 : index
    %c0_5 = arith.constant 0 : index
    %c0_6 = arith.constant 0 : index
    %4 = vector.load %arg4[%c0_4, %c0_5, %c0_6] : memref<1x8x1024xf32, #tpu.memory_space<vmem>>, vector<1x8x1024xf32>
    %5 = vector.shape_cast %4 : vector<1x8x1024xf32> to vector<8x1024xf32>
    %6 = vector.shape_cast %3 : vector<8x1024xf32> to vector<1x8x1024xf32>
    tpu.vector_store %arg4[%c0_4, %c0_5, %c0_6], %6 {strides = array<i32>} : memref<1x8x1024xf32, #tpu.memory_space<vmem>>, vector<1x8x1024xf32>,
    %cst_7 = arith.constant dense<0.000000e+00> : vector<8xf32>
    %7 = vector.multi_reduction <add>, %3, %cst_7 [1] : vector<8x1024xf32> to vector<8xf32>
    %8 = vector.shape_cast %7 : vector<8xf32> to vector<8x1xf32>
    %c0_8 = arith.constant 0 : index
    %c0_9 = arith.constant 0 : index
    %c0_10 = arith.constant 0 : index
    %c0_11 = arith.constant 0 : index
    %9 = vector.load %arg5[%c0_8, %c0_9, %c0_10, %c0_11] : memref<1x1x8x2xf32, #tpu.memory_space<vmem>>, vector<1x1x8x1xf32>
    %10 = vector.shape_cast %9 : vector<1x1x8x1xf32> to vector<8x1xf32>
    %11 = vector.shape_cast %8 : vector<8x1xf32> to vector<1x1x8x1xf32>
    tpu.vector_store %arg5[%c0_8, %c0_9, %c0_10, %c0_11], %11 {strides = array<i32>} : memref<1x1x8x2xf32, #tpu.memory_space<vmem>>, vector<1x1x8x1xf32>,
    %12 = arith.mulf %3, %3 : vector<8x1024xf32>
    %cst_12 = arith.constant dense<0.000000e+00> : vector<8xf32>
    %13 = vector.multi_reduction <add>, %12, %cst_12 [1] : vector<8x1024xf32> to vector<8xf32>
    %14 = vector.shape_cast %13 : vector<8xf32> to vector<8x1xf32>
    %c0_13 = arith.constant 0 : index
    %c0_14 = arith.constant 0 : index
    %c0_15 = arith.constant 0 : index
    %c1 = arith.constant 1 : index
    %15 = vector.load %arg5[%c0_13, %c0_14, %c0_15, %c1] : memref<1x1x8x2xf32, #tpu.memory_space<vmem>>, vector<1x1x8x1xf32>
    %16 = vector.shape_cast %15 : vector<1x1x8x1xf32> to vector<8x1xf32>
    %17 = vector.shape_cast %14 : vector<8x1xf32> to vector<1x1x8x1xf32>
    tpu.vector_store %arg5[%c0_13, %c0_14, %c0_15, %c1], %17 {strides = array<i32>} : memref<1x1x8x2xf32, #tpu.memory_space<vmem>>, vector<1x1x8x1xf32>,
    return
  }
  func.func @transform_0(%arg0: i32, %arg1: i32) -> (i32, i32) {
    %c0_i32 = arith.constant 0 : i32
    %c0_i32_0 = arith.constant 0 : i32
    %c0_i32_1 = arith.constant 0 : i32
    return %c0_i32, %c0_i32_0 : i32, i32
  }
  func.func @transform_1(%arg0: i32, %arg1: i32) -> (i32, i32, i32) {
    %c0_i32 = arith.constant 0 : i32
    %c0_i32_0 = arith.constant 0 : i32
    return %arg0, %c0_i32, %arg1 : i32, i32, i32
  }
  func.func @transform_2(%arg0: i32, %arg1: i32) -> (i32, i32, i32) {
    %c0_i32 = arith.constant 0 : i32
    %c0_i32_0 = arith.constant 0 : i32
    return %arg0, %c0_i32, %arg1 : i32, i32, i32
  }
  func.func @transform_3(%arg0: i32, %arg1: i32) -> (i32, i32, i32, i32) {
    %c0_i32 = arith.constant 0 : i32
    %c0_i32_0 = arith.constant 0 : i32
    %c0_i32_1 = arith.constant 0 : i32
    return %arg0, %arg1, %c0_i32, %c0_i32_0 : i32, i32, i32, i32
  }
}

module attributes {stable_mosaic.version = 11 : i64} {
  func.func @bn_relu_cat_kernel(%arg0: i32, %arg1: i32, %arg2: memref<8x2xf32, #tpu.memory_space<vmem>>, %arg3: memref<1x8x1024xf32, #tpu.memory_space<vmem>>, %arg4: memref<1x8x1024xf32, #tpu.memory_space<vmem>>, %arg5: memref<1x16x1024xf32, #tpu.memory_space<vmem>>) attributes {dimension_semantics = [#tpu.dimension_semantics<parallel>, #tpu.dimension_semantics<parallel>], iteration_bounds = array<i64: 2, 1>, scalar_prefetch = 0 : i64, scratch_operands = 0 : i64, tpu.core_type = #tpu.core_type<tc>, window_params = [{pipeline_mode = #tpu.pipeline_mode<synchronous>, transform_indices = @transform_0, window_bounds = array<i64: 8, 2>}, {transform_indices = @transform_1, window_bounds = array<i64: 1, 8, 1024>}, {transform_indices = @transform_2, window_bounds = array<i64: 1, 8, 1024>}, {transform_indices = @transform_3, window_bounds = array<i64: 1, 16, 1024>}]} {
    %c0 = arith.constant 0 : index
    %c0_0 = arith.constant 0 : index
    %0 = vector.load %arg2[%c0, %c0_0] : memref<8x2xf32, #tpu.memory_space<vmem>>, vector<8x1xf32>
    %c0_1 = arith.constant 0 : index
    %c1 = arith.constant 1 : index
    %1 = vector.load %arg2[%c0_1, %c1] : memref<8x2xf32, #tpu.memory_space<vmem>>, vector<8x1xf32>
    %c0_2 = arith.constant 0 : index
    %c0_3 = arith.constant 0 : index
    %c0_4 = arith.constant 0 : index
    %2 = vector.load %arg3[%c0_2, %c0_3, %c0_4] : memref<1x8x1024xf32, #tpu.memory_space<vmem>>, vector<1x8x1024xf32>
    %3 = vector.shape_cast %2 : vector<1x8x1024xf32> to vector<8x1024xf32>
    %4 = vector.broadcast %0 : vector<8x1xf32> to vector<8x1024xf32>
    %5 = arith.mulf %3, %4 : vector<8x1024xf32>
    %6 = vector.broadcast %1 : vector<8x1xf32> to vector<8x1024xf32>
    %7 = arith.addf %5, %6 : vector<8x1024xf32>
    %cst = arith.constant 0.000000e+00 : f32
    %8 = vector.broadcast %cst : f32 to vector<8x1024xf32>
    %9 = arith.maximumf %7, %8 : vector<8x1024xf32>
    %c0_5 = arith.constant 0 : index
    %c0_6 = arith.constant 0 : index
    %c0_7 = arith.constant 0 : index
    %10 = vector.load %arg5[%c0_5, %c0_6, %c0_7] : memref<1x16x1024xf32, #tpu.memory_space<vmem>>, vector<1x8x1024xf32>
    %11 = vector.shape_cast %10 : vector<1x8x1024xf32> to vector<8x1024xf32>
    %12 = vector.shape_cast %9 : vector<8x1024xf32> to vector<1x8x1024xf32>
    tpu.vector_store %arg5[%c0_5, %c0_6, %c0_7], %12 {strides = array<i32>} : memref<1x16x1024xf32, #tpu.memory_space<vmem>>, vector<1x8x1024xf32>,
    %c0_8 = arith.constant 0 : index
    %c0_9 = arith.constant 0 : index
    %c0_10 = arith.constant 0 : index
    %13 = vector.load %arg4[%c0_8, %c0_9, %c0_10] : memref<1x8x1024xf32, #tpu.memory_space<vmem>>, vector<1x8x1024xf32>
    %14 = vector.shape_cast %13 : vector<1x8x1024xf32> to vector<8x1024xf32>
    %c0_11 = arith.constant 0 : index
    %c8 = arith.constant 8 : index
    %c0_12 = arith.constant 0 : index
    %15 = vector.load %arg5[%c0_11, %c8, %c0_12] : memref<1x16x1024xf32, #tpu.memory_space<vmem>>, vector<1x8x1024xf32>
    %16 = vector.shape_cast %15 : vector<1x8x1024xf32> to vector<8x1024xf32>
    %17 = vector.shape_cast %14 : vector<8x1024xf32> to vector<1x8x1024xf32>
    tpu.vector_store %arg5[%c0_11, %c8, %c0_12], %17 {strides = array<i32>} : memref<1x16x1024xf32, #tpu.memory_space<vmem>>, vector<1x8x1024xf32>,
    return
  }
  func.func @transform_0(%arg0: i32, %arg1: i32) -> (i32, i32) {
    %c0_i32 = arith.constant 0 : i32
    %c0_i32_0 = arith.constant 0 : i32
    %c0_i32_1 = arith.constant 0 : i32
    return %c0_i32, %c0_i32_0 : i32, i32
  }
  func.func @transform_1(%arg0: i32, %arg1: i32) -> (i32, i32, i32) {
    %c0_i32 = arith.constant 0 : i32
    %c0_i32_0 = arith.constant 0 : i32
    return %arg0, %c0_i32, %arg1 : i32, i32, i32
  }
  func.func @transform_2(%arg0: i32, %arg1: i32) -> (i32, i32, i32) {
    %c0_i32 = arith.constant 0 : i32
    %c0_i32_0 = arith.constant 0 : i32
    return %arg0, %c0_i32, %arg1 : i32, i32, i32
  }
  func.func @transform_3(%arg0: i32, %arg1: i32) -> (i32, i32, i32) {
    %c0_i32 = arith.constant 0 : i32
    %c0_i32_0 = arith.constant 0 : i32
    return %arg0, %c0_i32, %arg1 : i32, i32, i32
  }
}

</mosaic_0001>

<llo_original>
// kernel: unet_up_forward.2
$region0: #{unet_up_forward.2}
  #allocation0 [shape = 'u32[]', space=smem, size = 0x4, offset = 0x4, fixed_abs, tag = 'smem constant byte address 0x4 - core index']
  #allocation1 [shape = 'u32[144,128]{1,0:T(1,128)}', space=vmem, size = 0x12000, scoped, tag = 'internal scratch']
  %s0 = inlined_call_operand.vmem [shape: bf16[8,64], index: 0, kind: input, shape index: {}]
  %s1 = inlined_call_operand.vmem [shape: bf16[2,64,1024], index: 1, kind: input, shape index: {}]
  %s2 = inlined_call_operand.vmem [shape: f32[2,8,1024], index: 2, kind: output, shape index: {0}]
  %s3 = inlined_call_operand.vmem [shape: f32[2,1,8,2], index: 3, kind: output, shape index: {1}]
  %4 = xla_tuple %s2, %s3
  %s5 = sld [smem:[#allocation0]]
  $region49: #{unet_up_forward.2} parent=0
    _
  %s7 = ssub.s32 1, %s5
  %s8 = scalar_select 0, %s7, %s5
  loop: start=0, step=1, limit=4
  $region2: #{unet_up_forward.2} parent=0 // loop_pre_header
    _
  $region3: #{unet_up_forward.2} parent=0 // loop_header
    %s10 = sphi 0, %s14
    %p11 = scmp.ge.s32.totalorder %s10, 4
    %s17 = sphi 0, %s29
    %s18 = sphi 0, %s25
    %s19 = sphi 0, %s17
    %s20 = sphi 0, %s18
    %s21 = sphi 0, %s19
    %s22 = sphi 0, %s20
    %s30 = sphi 0, %s30
    %s32 = sphi 0, %s30
    %s33 = sphi 0, %s32
    %s47 = sphi 0, %s33
    %s55 = sphi 0, %s57
    %s58 = sphi 0, %s55
    %s59 = sphi 0, %s58
    %s75 = sphi 0, %s59
    %s83 = sphi 0, %s85
    %s86 = sphi 0, %s83
    %s87 = sphi 0, %s86
    %s103 = sphi 0, %s87
    %s111 = sphi 0, %s113
    %s114 = sphi 0, %s111
    %s115 = sphi 0, %s114
    %s131 = sphi 0, %s115
  $region4: #{unet_up_forward.2} parent=0 // loop_header_branch
    %13 = sbr.rel (%p11) target = $region8
  $region5: #{unet_up_forward.2} parent=0 // loop_body
    %s15 = ssub.s32 %s10, 1
    %s16 = ssub.s32 %s10, 2
    %s23 = sadd.s32 1, %s18
    %p24 = scmp.ge.s32.totalorder %s23, 1
    %s25 = scalar_select %p24, 0, %s23
    %s26 = sadd.s32 1, %s17
    %s27 = scalar_select %p24, %s26, %s17
    %p28 = scmp.ge.s32.totalorder %s27, 2
    %s29 = scalar_select %p28, 0, %s27
    %s31 = sadd.s32 %s30, 1
    %p34 = scmp.eq.s32.totalorder %s10, 1
    %p35 = scmp.ne.s32.totalorder %s30, %s32
    %p36 = scmp.eq.s32.totalorder %s10, 0
    %p37 = por %p35, %p36
    %p38 = scmp.ne.s32.totalorder %s30, %s32
    %p39 = scmp.eq.s32.totalorder %s15, 1
    %p40 = por %p38, %p39
    %p41 = scmp.ne.s32.totalorder %s32, %s33
    %p42 = scmp.eq.s32.totalorder %s15, 0
    %p43 = por %p41, %p42
    %p44 = scmp.ne.s32.totalorder %s32, %s33
    %p45 = scmp.eq.s32.totalorder %s16, 1
    %p46 = por %p44, %p45
    %p48 = scmp.ne.s32.totalorder %s33, %s47
    %p49 = scmp.eq.s32.totalorder %s16, 0
    %p50 = por %p48, %p49
    %s51 = ssub.s32 %s17, %s29
    %s52 = ssub.s32 %s18, %s25
    %s53 = sor.u32 %s51, %s52
    %p54 = scmp.eq.s32.totalorder %s53, 0
    %s56 = sadd.s32 %s55, 1
    %s57 = scalar_select %p54, %s55, %s56
    %p60 = pneg %p54
    %p61 = scmp.eq.s32.totalorder %s10, 1
    %p62 = por %p60, %p61
    %p63 = scmp.ne.s32.totalorder %s55, %s58
    %p64 = scmp.eq.s32.totalorder %s10, 0
    %p65 = por %p63, %p64
    %p66 = scmp.ne.s32.totalorder %s55, %s58
    %p67 = scmp.eq.s32.totalorder %s15, 1
    %p68 = por %p66, %p67
    %p69 = scmp.ne.s32.totalorder %s58, %s59
    %p70 = scmp.eq.s32.totalorder %s15, 0
    %p71 = por %p69, %p70
    %p72 = scmp.ne.s32.totalorder %s58, %s59
    %p73 = scmp.eq.s32.totalorder %s16, 1
    %p74 = por %p72, %p73
    %p76 = scmp.ne.s32.totalorder %s59, %s75
    %p77 = scmp.eq.s32.totalorder %s16, 0
    %p78 = por %p76, %p77
    %s79 = ssub.s32 %s17, %s29
    %s80 = ssub.s32 %s18, %s25
    %s81 = sor.u32 %s79, %s80
    %p82 = scmp.eq.s32.totalorder %s81, 0
    %s84 = sadd.s32 %s83, 1
    %s85 = scalar_select %p82, %s83, %s84
    %p88 = pneg %p82
    %p89 = scmp.eq.s32.totalorder %s10, 1
    %p90 = por %p88, %p89
    %p91 = scmp.ne.s32.totalorder %s83, %s86
    %p92 = scmp.eq.s32.totalorder %s10, 0
    %p93 = por %p91, %p92
    %p94 = scmp.ne.s32.totalorder %s83, %s86
    %p95 = scmp.eq.s32.totalorder %s15, 1
    %p96 = por %p94, %p95
    %p97 = scmp.ne.s32.totalorder %s86, %s87
    %p98 = scmp.eq.s32.totalorder %s15, 0
    %p99 = por %p97, %p98
    %p100 = scmp.ne.s32.totalorder %s86, %s87
    %p101 = scmp.eq.s32.totalorder %s16, 1
    %p102 = por %p100, %p101
    %p104 = scmp.ne.s32.totalorder %s87, %s103
    %p105 = scmp.eq.s32.totalorder %s16, 0
    %p106 = por %p104, %p105
    %s107 = ssub.s32 %s17, %s29
    %s108 = ssub.s32 %s18, %s25
    %s109 = sor.u32 %s107, %s108
    %p110 = scmp.eq.s32.totalorder %s109, 0
    %s112 = sadd.s32 %s111, 1
    %s113 = scalar_select %p110, %s111, %s112
    %p116 = pneg %p110
    %p117 = scmp.eq.s32.totalorder %s10, 1
    %p118 = por %p116, %p117
    %p119 = scmp.ne.s32.totalorder %s111, %s114
    %p120 = scmp.eq.s32.totalorder %s10, 0
    %p121 = por %p119, %p120
    %p122 = scmp.ne.s32.totalorder %s111, %s114
    %p123 = scmp.eq.s32.totalorder %s15, 1
    %p124 = por %p122, %p123
    %p125 = scmp.ne.s32.totalorder %s114, %s115
    %p126 = scmp.eq.s32.totalorder %s15, 0
    %p127 = por %p125, %p126
    %p128 = scmp.ne.s32.totalorder %s114, %s115
    %p129 = scmp.eq.s32.totalorder %s16, 1
    %p130 = por %p128, %p129
    %p132 = scmp.ne.s32.totalorder %s115, %s131
    %p133 = scmp.eq.s32.totalorder %s16, 0
    %p134 = por %p132, %p133
    %p135 = scmp.le.s32.totalorder 1, %s10
    %p136 = scmp.lt.s32.totalorder %s10, 3
    %p137 = pnand %p135, %p136
    %p138 = pneg %p137
    // Predicated region
    $region9: #{unet_up_forward.2} parent=5 // pred_check
      _
    $region10: #{unet_up_forward.2} parent=5 // pred_check_branch
      %140 = sbr.rel (%p137) target = $region12
    $region11: #{unet_up_forward.2} parent=5 // pred_region
      %s141 = ssub.s32 %s10, 1
      // Predicated region
      $region13: #{unet_up_forward.2} parent=11 // pred_check
        %p142 = pneg %p43
      $region14: #{unet_up_forward.2} parent=11 // pred_check_branch
        %144 = sbr.rel (%p142) target = $region16
      $region15: #{unet_up_forward.2} parent=11 // pred_region
        _
      $region16: #{unet_up_forward.2} parent=11 // pred_fallthru
        _
    $region12: #{unet_up_forward.2} parent=5 // pred_fallthru
      _
    %p145 = scmp.lt.s32.totalorder %s10, 2
    // Predicated region
    $region17: #{unet_up_forward.2} parent=5 // pred_check
      %p146 = pneg %p145
    $region18: #{unet_up_forward.2} parent=5 // pred_check_branch
      %148 = sbr.rel (%p146) target = $region20
    $region19: #{unet_up_forward.2} parent=5 // pred_region
      // Predicated region
      $region21: #{unet_up_forward.2} parent=19 // pred_check
        %p149 = pneg %p65
      $region22: #{unet_up_forward.2} parent=19 // pred_check_branch
        %151 = sbr.rel (%p149) target = $region24
      $region23: #{unet_up_forward.2} parent=19 // pred_region
        %s152 = smul.u32 8, %s18
        %p153 = scmp.lt.s32.totalorder %s17, 1
        %s154 = scalar_select %p153, %s17, 1
        %p155 = scmp.lt.s32.totalorder %s152, 7
        %s156 = scalar_select %p155, %s152, 7
        %s157 = smul.addr %s154, 64
        %s158 = sadd.s32 %s156, %s157
        %s159 = smul.addr %s158, 4
        %s160 = scalar_lea.vmem %s1, %s159
        %s161 = smul.u32 8, %s18
      $region24: #{unet_up_forward.2} parent=19 // pred_fallthru
        _
    $region20: #{unet_up_forward.2} parent=5 // pred_fallthru
      _
    %p162 = scmp.le.s32.totalorder 1, %s10
    %p163 = scmp.lt.s32.totalorder %s10, 3
    %p164 = pnand %p162, %p163
    %p165 = pneg %p164
    // Predicated region
    $region25: #{unet_up_forward.2} parent=5 // pred_check
      _
    $region26: #{unet_up_forward.2} parent=5 // pred_check_branch
      %167 = sbr.rel (%p164) target = $region28
    $region27: #{unet_up_forward.2} parent=5 // pred_region
      %s168 = ssub.s32 %s10, 1
      %p169 = pneg %p43
      %p170 = pneg %p40
      %s171 = smul.u32 8, %s20
      %p172 = scmp.lt.s32.totalorder %s19, 1
      %s173 = scalar_select %p172, %s19, 1
      %p174 = scmp.lt.s32.totalorder %s171, 7
      %s175 = scalar_select %p174, %s171, 7
      %s176 = smul.addr %s173, 64
      %s177 = sadd.s32 %s175, %s176
      %s178 = smul.addr %s177, 4
      %s179 = scalar_lea.vmem %s1, %s178
      %p180 = pneg %p71
      %p181 = pneg %p68
      %p182 = pneg %p99
      %p183 = pneg %p96
      %s184 = smul.u32 8, %s20
      %p185 = scmp.lt.s32.totalorder %s19, 1
      %s186 = scalar_select %p185, %s19, 1
      %p187 = scmp.lt.s32.totalorder %s184, 7
      %s188 = scalar_select %p187, %s184, 7
      %s189 = smul.addr %s186, 8
      %s190 = sadd.s32 %s188, %s189
      %s191 = smul.addr %s190, 8
      %s192 = scalar_lea.vmem %s2, %s191
      %p193 = pneg %p127
      %p194 = pneg %p124
      %p195 = scmp.lt.s32.totalorder %s19, 1
      %s196 = scalar_select %p195, %s19, 1
      %p197 = scmp.lt.s32.totalorder %s20, 0
      %s198 = scalar_select %p197, %s20, 0
      %s199 = sadd.s32 %s198, %s196
      %s200 = smul.addr %s199, 8
      %s201 = scalar_lea.vmem %s3, %s200
      %s202 = smul.u32 8, %s20
      %p203 = scmp.lt.s32.totalorder %s19, 1
      %s204 = scalar_select %p203, %s19, 1
      %p205 = scmp.lt.s32.totalorder %s202, 7
      %s206 = scalar_select %p205, %s202, 7
      %s207 = smul.addr %s204, 64
      %s208 = sadd.s32 %s206, %s207
      %s209 = smul.addr %s208, 4
      %s210 = scalar_lea.vmem %s1, %s209
      %s211 = smul.u32 8, %s20
      %s212 = smul.u32 8, %s20
      %p213 = scmp.lt.s32.totalorder %s19, 1
      %s214 = scalar_select %p213, %s19, 1
      %p215 = scmp.lt.s32.totalorder %s212, 7
      %s216 = scalar_select %p215, %s212, 7
      %s217 = smul.addr %s214, 8
      %s218 = sadd.s32 %s216, %s217
      %s219 = smul.addr %s218, 8
      %s220 = scalar_lea.vmem %s2, %s219
      %s221 = smul.u32 8, %s20
      %p222 = scmp.lt.s32.totalorder %s19, 1
      %s223 = scalar_select %p222, %s19, 1
      %p224 = scmp.lt.s32.totalorder %s20, 0
      %s225 = scalar_select %p224, %s20, 0
      %s226 = sadd.s32 %s225, %s223
      %s227 = smul.addr %s226, 8
      %s228 = scalar_lea.vmem %s3, %s227
      %v230 = vld [vmem:[%s0] sm:$0xf]
      %v231 = vld [vmem:[%s210] sm:$0xff]
      %v232 = vld [vmem:[%s210 + $0x8] sm:$0xff]
      %v233 = vld [vmem:[%s210 + $0x10] sm:$0xff]
      %v234 = vld [vmem:[%s210 + $0x18] sm:$0xff]
      %v235 = vld [vmem:[%s210 + $0x20] sm:$0xff]
      %v236 = vld [vmem:[%s210 + $0x28] sm:$0xff]
      %v237 = vld [vmem:[%s210 + $0x30] sm:$0xff]
      %v238 = vld [vmem:[%s210 + $0x38] sm:$0xff]
      %v239 = vld [vmem:[%s210 + $0x40] sm:$0xff]
      %v240 = vld [vmem:[%s210 + $0x48] sm:$0xff]
      %v241 = vld [vmem:[%s210 + $0x50] sm:$0xff]
      %v242 = vld [vmem:[%s210 + $0x58] sm:$0xff]
      %v243 = vld [vmem:[%s210 + $0x60] sm:$0xff]
      %v244 = vld [vmem:[%s210 + $0x68] sm:$0xff]
      %v245 = vld [vmem:[%s210 + $0x70] sm:$0xff]
      %v246 = vld [vmem:[%s210 + $0x78] sm:$0xff]
      %v247 = vld [vmem:[%s210 + $0x80] sm:$0xff]
      %v248 = vld [vmem:[%s210 + $0x88] sm:$0xff]
      %v249 = vld [vmem:[%s210 + $0x90] sm:$0xff]
      %v250 = vld [vmem:[%s210 + $0x98] sm:$0xff]
      %v251 = vld [vmem:[%s210 + $0xa0] sm:$0xff]
      %v252 = vld [vmem:[%s210 + $0xa8] sm:$0xff]
      %v253 = vld [vmem:[%s210 + $0xb0] sm:$0xff]
      %v254 = vld [vmem:[%s210 + $0xb8] sm:$0xff]
      %v255 = vld [vmem:[%s210 + $0xc0] sm:$0xff]
      %v256 = vld [vmem:[%s210 + $0xc8] sm:$0xff]
      %v257 = vld [vmem:[%s210 + $0xd0] sm:$0xff]
      %v258 = vld [vmem:[%s210 + $0xd8] sm:$0xff]
      %v259 = vld [vmem:[%s210 + $0xe0] sm:$0xff]
      %v260 = vld [vmem:[%s210 + $0xe8] sm:$0xff]
      %v261 = vld [vmem:[%s210 + $0xf0] sm:$0xff]
      %v262 = vld [vmem:[%s210 + $0xf8] sm:$0xff]
      %v295 = vunpack.c.l.b16 %v231
      %v296 = vunpack.c.h.b16 %v231
      %v297 = vunpack.c.l.b16 %v232
      %v298 = vunpack.c.h.b16 %v232
      %v299 = vunpack.c.l.b16 %v233
      %v300 = vunpack.c.h.b16 %v233
      %v301 = vunpack.c.l.b16 %v234
      %v302 = vunpack.c.h.b16 %v234
      %v303 = vunpack.c.l.b16 %v235
      %v304 = vunpack.c.h.b16 %v235
      %v305 = vunpack.c.l.b16 %v236
      %v306 = vunpack.c.h.b16 %v236
      %v307 = vunpack.c.l.b16 %v237
      %v308 = vunpack.c.h.b16 %v237
      %v309 = vunpack.c.l.b16 %v238
      %v310 = vunpack.c.h.b16 %v238
      %v311 = vunpack.c.l.b16 %v239
      %v312 = vunpack.c.h.b16 %v239
      %v313 = vunpack.c.l.b16 %v240
      %v314 = vunpack.c.h.b16 %v240
      %v315 = vunpack.c.l.b16 %v241
      %v316 = vunpack.c.h.b16 %v241
      %v317 = vunpack.c.l.b16 %v242
      %v318 = vunpack.c.h.b16 %v242
      %v319 = vunpack.c.l.b16 %v243
      %v320 = vunpack.c.h.b16 %v243
      %v321 = vunpack.c.l.b16 %v244
      %v322 = vunpack.c.h.b16 %v244
      %v323 = vunpack.c.l.b16 %v245
      %v324 = vunpack.c.h.b16 %v245
      %v325 = vunpack.c.l.b16 %v246
      %v326 = vunpack.c.h.b16 %v246
      %v327 = vunpack.c.l.b16 %v247
      %v328 = vunpack.c.h.b16 %v247
      %v329 = vunpack.c.l.b16 %v248
      %v330 = vunpack.c.h.b16 %v248
      %v331 = vunpack.c.l.b16 %v249
      %v332 = vunpack.c.h.b16 %v249
      %v333 = vunpack.c.l.b16 %v250
      %v334 = vunpack.c.h.b16 %v250
      %v335 = vunpack.c.l.b16 %v251
      %v336 = vunpack.c.h.b16 %v251
      %v337 = vunpack.c.l.b16 %v252
      %v338 = vunpack.c.h.b16 %v252
      %v339 = vunpack.c.l.b16 %v253
      %v340 = vunpack.c.h.b16 %v253
      %v341 = vunpack.c.l.b16 %v254
      %v342 = vunpack.c.h.b16 %v254
      %v343 = vunpack.c.l.b16 %v255
      %v344 = vunpack.c.h.b16 %v255
      %v345 = vunpack.c.l.b16 %v256
      %v346 = vunpack.c.h.b16 %v256
      %v347 = vunpack.c.l.b16 %v257
      %v348 = vunpack.c.h.b16 %v257
      %v349 = vunpack.c.l.b16 %v258
      %v350 = vunpack.c.h.b16 %v258
      %v351 = vunpack.c.l.b16 %v259
      %v352 = vunpack.c.h.b16 %v259
      %v353 = vunpack.c.l.b16 %v260
      %v354 = vunpack.c.h.b16 %v260
      %v355 = vunpack.c.l.b16 %v261
      %v356 = vunpack.c.h.b16 %v261
      %v357 = vunpack.c.l.b16 %v262
      %v358 = vunpack.c.h.b16 %v262
      %v359 = vpack.c.b16 %v303, %v295
      %v360 = vpack.c.b16 %v304, %v296
      %v361 = vpack.c.b16 %v305, %v297
      %v362 = vpack.c.b16 %v306, %v298
      %v363 = vpack.c.b16 %v307, %v299
      %v364 = vpack.c.b16 %v308, %v300
      %v365 = vpack.c.b16 %v309, %v301
      %v366 = vpack.c.b16 %v310, %v302
      %v367 = vpack.c.b16 %v319, %v311
      %v368 = vpack.c.b16 %v320, %v312
      %v369 = vpack.c.b16 %v321, %v313
      %v370 = vpack.c.b16 %v322, %v314
      %v371 = vpack.c.b16 %v323, %v315
      %v372 = vpack.c.b16 %v324, %v316
      %v373 = vpack.c.b16 %v325, %v317
      %v374 = vpack.c.b16 %v326, %v318
      %v375 = vpack.c.b16 %v335, %v327
      %v376 = vpack.c.b16 %v336, %v328
      %v377 = vpack.c.b16 %v337, %v329
      %v378 = vpack.c.b16 %v338, %v330
      %v379 = vpack.c.b16 %v339, %v331
      %v380 = vpack.c.b16 %v340, %v332
      %v381 = vpack.c.b16 %v341, %v333
      %v382 = vpack.c.b16 %v342, %v334
      %v383 = vpack.c.b16 %v351, %v343
      %v384 = vpack.c.b16 %v352, %v344
      %v385 = vpack.c.b16 %v353, %v345
      %v386 = vpack.c.b16 %v354, %v346
      %v387 = vpack.c.b16 %v355, %v347
      %v388 = vpack.c.b16 %v356, %v348
      %v389 = vpack.c.b16 %v357, %v349
      %v390 = vpack.c.b16 %v358, %v350
      %vm423 = vcmask 523264
      %v425 = vsel %vm423, %v230, 0
      %427 = vmatprep.subr.bf16.mxu0 0
      %428 = vmatpush1.bf16.msra.mxu0 0
      %429 = vmatprep.subr.bf16.mxu0 0
      %430 = vmatpush1.bf16.msra.mxu0 0
      %431 = vmatprep.subr.bf16.mxu0 0
      %432 = vmatpush1.bf16.msra.mxu0 0
      %433 = vmatprep.subr.bf16.mxu0 0
      %434 = vmatpush1.bf16.msra.mxu0 0
      %435 = vmatprep.subr.bf16.mxu0 %v384
      %436 = vmatpush1.bf16.msra.mxu0 %v383
      %437 = vmatprep.subr.bf16.mxu0 %v376
      %438 = vmatpush1.bf16.msra.mxu0 %v375
      %439 = vmatprep.subr.bf16.mxu0 %v368
      %440 = vmatpush1.bf16.msra.mxu0 %v367
      %441 = vmatprep.subr.bf16.mxu0 %v360
      %442 = vmatpush1.bf16.msra.mxu0 %v359
      %443 = vmatprep.subr.bf16.mxu0 0
      %444 = vmatpush2.bf16.msra.mxu0 0
      %445 = vmatprep.subr.bf16.mxu0 0
      %446 = vmatpush2.bf16.msra.mxu0 0
      %447 = vmatprep.subr.bf16.mxu0 0
      %448 = vmatpush2.bf16.msra.mxu0 0
      %449 = vmatprep.subr.bf16.mxu0 0
      %450 = vmatpush2.bf16.msra.mxu0 0
      %451 = vmatprep.subr.bf16.mxu0 0
      %452 = vmatpush2.bf16.msra.mxu0 0
      %453 = vmatprep.subr.bf16.mxu0 0
      %454 = vmatpush2.bf16.msra.mxu0 0
      %455 = vmatprep.subr.bf16.mxu0 0
      %456 = vmatpush2.bf16.msra.mxu0 0
      %457 = vmatprep.subr.bf16.mxu0 0
      %458 = vmatpush2.bf16.msra.mxu0 0
      %459 = vmatprep.mubr.bf16.mxu0 0
      %460 = vmatmul.mubr.bf16.gmra.mxu0 %v425
      %v461 = vpop.f32.mrf.mxu0
      %v462 = vadd.f32 0.0, %v461
      %v463 = vpop.f32.mrf.mxu0
      %v464 = vadd.f32 0.0, %v463
      %v465 = vpop.f32.mrf.mxu0
      %v466 = vpop.f32.mrf.mxu0
      %467 = vdwg.mxu0
      %468 = vmatprep.subr.bf16.mxu0 0
      %469 = vmatpush1.bf16.msra.mxu0 0
      %470 = vmatprep.subr.bf16.mxu0 0
      %471 = vmatpush1.bf16.msra.mxu0 0
      %472 = vmatprep.subr.bf16.mxu0 0
      %473 = vmatpush1.bf16.msra.mxu0 0
      %474 = vmatprep.subr.bf16.mxu0 0
      %475 = vmatpush1.bf16.msra.mxu0 0
      %476 = vmatprep.subr.bf16.mxu0 %v386
      %477 = vmatpush1.bf16.msra.mxu0 %v385
      %478 = vmatprep.subr.bf16.mxu0 %v378
      %479 = vmatpush1.bf16.msra.mxu0 %v377
      %480 = vmatprep.subr.bf16.mxu0 %v370
      %481 = vmatpush1.bf16.msra.mxu0 %v369
      %482 = vmatprep.subr.bf16.mxu0 %v362
      %483 = vmatpush1.bf16.msra.mxu0 %v361
      %484 = vmatprep.subr.bf16.mxu0 0
      %485 = vmatpush2.bf16.msra.mxu0 0
      %486 = vmatprep.subr.bf16.mxu0 0
      %487 = vmatpush2.bf16.msra.mxu0 0
      %488 = vmatprep.subr.bf16.mxu0 0
      %489 = vmatpush2.bf16.msra.mxu0 0
      %490 = vmatprep.subr.bf16.mxu0 0
      %491 = vmatpush2.bf16.msra.mxu0 0
      %492 = vmatprep.subr.bf16.mxu0 0
      %493 = vmatpush2.bf16.msra.mxu0 0
      %494 = vmatprep.subr.bf16.mxu0 0
      %495 = vmatpush2.bf16.msra.mxu0 0
      %496 = vmatprep.subr.bf16.mxu0 0
      %497 = vmatpush2.bf16.msra.mxu0 0
      %498 = vmatprep.subr.bf16.mxu0 0
      %499 = vmatpush2.bf16.msra.mxu0 0
      %500 = vmatprep.mubr.bf16.mxu0 0
      %501 = vmatmul.mubr.bf16.gmra.mxu0 %v425
      %v502 = vpop.f32.mrf.mxu0
      %v503 = vadd.f32 0.0, %v502
      %v504 = vpop.f32.mrf.mxu0
      %v505 = vadd.f32 0.0, %v504
      %v506 = vpop.f32.mrf.mxu0
      %v507 = vpop.f32.mrf.mxu0
      %508 = vdwg.mxu0
      %509 = vmatprep.subr.bf16.mxu0 0
      %510 = vmatpush1.bf16.msra.mxu0 0
      %511 = vmatprep.subr.bf16.mxu0 0
      %512 = vmatpush1.bf16.msra.mxu0 0
      %513 = vmatprep.subr.bf16.mxu0 0
      %514 = vmatpush1.bf16.msra.mxu0 0
      %515 = vmatprep.subr.bf16.mxu0 0
      %516 = vmatpush1.bf16.msra.mxu0 0
      %517 = vmatprep.subr.bf16.mxu0 %v388
      %518 = vmatpush1.bf16.msra.mxu0 %v387
      %519 = vmatprep.subr.bf16.mxu0 %v380
      %520 = vmatpush1.bf16.msra.mxu0 %v379
      %521 = vmatprep.subr.bf16.mxu0 %v372
      %522 = vmatpush1.bf16.msra.mxu0 %v371
      %523 = vmatprep.subr.bf16.mxu0 %v364
      %524 = vmatpush1.bf16.msra.mxu0 %v363
      %525 = vmatprep.subr.bf16.mxu0 0
      %526 = vmatpush2.bf16.msra.mxu0 0
      %527 = vmatprep.subr.bf16.mxu0 0
      %528 = vmatpush2.bf16.msra.mxu0 0
      %529 = vmatprep.subr.bf16.mxu0 0
      %530 = vmatpush2.bf16.msra.mxu0 0
      %531 = vmatprep.subr.bf16.mxu0 0
      %532 = vmatpush2.bf16.msra.mxu0 0
      %533 = vmatprep.subr.bf16.mxu0 0
      %534 = vmatpush2.bf16.msra.mxu0 0
      %535 = vmatprep.subr.bf16.mxu0 0
      %536 = vmatpush2.bf16.msra.mxu0 0
      %537 = vmatprep.subr.bf16.mxu0 0
      %538 = vmatpush2.bf16.msra.mxu0 0
      %539 = vmatprep.subr.bf16.mxu0 0
      %540 = vmatpush2.bf16.msra.mxu0 0
      %541 = vmatprep.mubr.bf16.mxu0 0
      %542 = vmatmul.mubr.bf16.gmra.mxu0 %v425
      %v543 = vpop.f32.mrf.mxu0
      %v544 = vadd.f32 0.0, %v543
      %v545 = vpop.f32.mrf.mxu0
      %v546 = vadd.f32 0.0, %v545
      %v547 = vpop.f32.mrf.mxu0
      %v548 = vpop.f32.mrf.mxu0
      %549 = vdwg.mxu0
      %550 = vmatprep.subr.bf16.mxu0 0
      %551 = vmatpush1.bf16.msra.mxu0 0
      %552 = vmatprep.subr.bf16.mxu0 0
      %553 = vmatpush1.bf16.msra.mxu0 0
      %554 = vmatprep.subr.bf16.mxu0 0
      %555 = vmatpush1.bf16.msra.mxu0 0
      %556 = vmatprep.subr.bf16.mxu0 0
      %557 = vmatpush1.bf16.msra.mxu0 0
      %558 = vmatprep.subr.bf16.mxu0 %v390
      %559 = vmatpush1.bf16.msra.mxu0 %v389
      %560 = vmatprep.subr.bf16.mxu0 %v382
      %561 = vmatpush1.bf16.msra.mxu0 %v381
      %562 = vmatprep.subr.bf16.mxu0 %v374
      %563 = vmatpush1.bf16.msra.mxu0 %v373
      %564 = vmatprep.subr.bf16.mxu0 %v366
      %565 = vmatpush1.bf16.msra.mxu0 %v365
      %566 = vmatprep.subr.bf16.mxu0 0
      %567 = vmatpush2.bf16.msra.mxu0 0
      %568 = vmatprep.subr.bf16.mxu0 0
      %569 = vmatpush2.bf16.msra.mxu0 0
      %570 = vmatprep.subr.bf16.mxu0 0
      %571 = vmatpush2.bf16.msra.mxu0 0
      %572 = vmatprep.subr.bf16.mxu0 0
      %573 = vmatpush2.bf16.msra.mxu0 0
      %574 = vmatprep.subr.bf16.mxu0 0
      %575 = vmatpush2.bf16.msra.mxu0 0
      %576 = vmatprep.subr.bf16.mxu0 0
      %577 = vmatpush2.bf16.msra.mxu0 0
      %578 = vmatprep.subr.bf16.mxu0 0
      %579 = vmatpush2.bf16.msra.mxu0 0
      %580 = vmatprep.subr.bf16.mxu0 0
      %581 = vmatpush2.bf16.msra.mxu0 0
      %582 = vmatprep.mubr.bf16.mxu0 0
      %583 = vmatmul.mubr.bf16.gmra.mxu0 %v425
      %v584 = vpop.f32.mrf.mxu0
      %v585 = vadd.f32 0.0, %v584
      %v586 = vpop.f32.mrf.mxu0
      %v587 = vadd.f32 0.0, %v586
      %v588 = vpop.f32.mrf.mxu0
      %v589 = vpop.f32.mrf.mxu0
      %590 = vdwg.mxu0
      %591 = vst [vmem:[%s220] sm:$0xff] %v462
      %592 = vst [vmem:[%s220 + $0x8] sm:$0xff] %v464
      %593 = vst [vmem:[%s220 + $0x10] sm:$0xff] %v503
      %594 = vst [vmem:[%s220 + $0x18] sm:$0xff] %v505
      %595 = vst [vmem:[%s220 + $0x20] sm:$0xff] %v544
      %596 = vst [vmem:[%s220 + $0x28] sm:$0xff] %v546
      %597 = vst [vmem:[%s220 + $0x30] sm:$0xff] %v585
      %598 = vst [vmem:[%s220 + $0x38] sm:$0xff] %v587
      %v599 = vadd.f32 %v462, %v464
      %v600 = vadd.f32 %v599, %v503
      %v601 = vadd.f32 %v600, %v505
      %v602 = vadd.f32 %v601, %v544
      %v603 = vadd.f32 %v602, %v546
      %v604 = vadd.f32 %v603, %v585
      %v605 = vadd.f32 %v604, %v587
      %606 = vadd.xlane.f32.xlu0 %v605
      %v607 = vpop.xlane.xlu0 %606
      %vm608 = vcmask 7168
      %609 = vst.msk [vmem:[%s228] sm:$0xff] %vm608, %v607
      %v610 = vmul.f32 %v462, %v462
      %v611 = vmul.f32 %v464, %v464
      %v612 = vmul.f32 %v503, %v503
      %v613 = vmul.f32 %v505, %v505
      %v614 = vmul.f32 %v544, %v544
      %v615 = vmul.f32 %v546, %v546
      %v616 = vmul.f32 %v585, %v585
      %v617 = vmul.f32 %v587, %v587
      %v618 = vadd.f32 %v610, %v611
      %v619 = vadd.f32 %v618, %v612
      %v620 = vadd.f32 %v619, %v613
      %v621 = vadd.f32 %v620, %v614
      %v622 = vadd.f32 %v621, %v615
      %v623 = vadd.f32 %v622, %v616
      %v624 = vadd.f32 %v623, %v617
      %625 = vadd.xlane.f32.xlu0 %v624
      %v626 = vpop.xlane.xlu0 %625
      %vm627 = vcmask 15368
      %628 = vst.msk [vmem:[%s228] sm:$0xff] %vm627, %v626
      %s629 = smul.u32 8, %s20
      %p630 = scmp.lt.s32.totalorder %s19, 1
      %s631 = scalar_select %p630, %s19, 1
      %p632 = scmp.lt.s32.totalorder %s629, 7
      %s633 = scalar_select %p632, %s629, 7
      %s634 = smul.addr %s631, 8
      %s635 = sadd.s32 %s633, %s634
      %s636 = smul.addr %s635, 8
      %s637 = scalar_lea.vmem %s2, %s636
      %p638 = scmp.lt.s32.totalorder %s19, 1
      %s639 = scalar_select %p638, %s19, 1
      %p640 = scmp.lt.s32.totalorder %s20, 0
      %s641 = scalar_select %p640, %s20, 0
      %s642 = sadd.s32 %s641, %s639
      %s643 = smul.addr %s642, 8
      %s644 = scalar_lea.vmem %s3, %s643
      // Predicated region
      $region29: #{unet_up_forward.2} parent=27 // pred_check
        %p645 = pneg %p96
      $region30: #{unet_up_forward.2} parent=27 // pred_check_branch
        %647 = sbr.rel (%p645) target = $region32
      $region31: #{unet_up_forward.2} parent=27 // pred_region
        %s648 = smul.u32 8, %s20
      $region32: #{unet_up_forward.2} parent=27 // pred_fallthru
        _
      // Predicated region
      $region33: #{unet_up_forward.2} parent=27 // pred_check
        %p649 = pneg %p124
      $region34: #{unet_up_forward.2} parent=27 // pred_check_branch
        %651 = sbr.rel (%p649) target = $region36
      $region35: #{unet_up_forward.2} parent=27 // pred_region
        _
      $region36: #{unet_up_forward.2} parent=27 // pred_fallthru
        _
    $region28: #{unet_up_forward.2} parent=5 // pred_fallthru
      _
    %p652 = scmp.le.s32.totalorder 2, %s10
    // Predicated region
    $region37: #{unet_up_forward.2} parent=5 // pred_check
      %p653 = pneg %p652
    $region38: #{unet_up_forward.2} parent=5 // pred_check_branch
      %655 = sbr.rel (%p653) target = $region40
    $region39: #{unet_up_forward.2} parent=5 // pred_region
      %s656 = ssub.s32 %s10, 2
      // Predicated region
      $region41: #{unet_up_forward.2} parent=39 // pred_check
        %p657 = pneg %p102
      $region42: #{unet_up_forward.2} parent=39 // pred_check_branch
        %659 = sbr.rel (%p657) target = $region44
      $region43: #{unet_up_forward.2} parent=39 // pred_region
        %s660 = smul.u32 8, %s22
        %p661 = scmp.lt.s32.totalorder %s21, 1
        %s662 = scalar_select %p661, %s21, 1
        %p663 = scmp.lt.s32.totalorder %s660, 7
        %s664 = scalar_select %p663, %s660, 7
        %s665 = smul.addr %s662, 8
        %s666 = sadd.s32 %s664, %s665
        %s667 = smul.addr %s666, 8
        %s668 = scalar_lea.vmem %s2, %s667
      $region44: #{unet_up_forward.2} parent=39 // pred_fallthru
        _
      // Predicated region
      $region45: #{unet_up_forward.2} parent=39 // pred_check
        %p669 = pneg %p130
      $region46: #{unet_up_forward.2} parent=39 // pred_check_branch
        %671 = sbr.rel (%p669) target = $region48
      $region47: #{unet_up_forward.2} parent=39 // pred_region
        %p672 = scmp.lt.s32.totalorder %s21, 1
        %s673 = scalar_select %p672, %s21, 1
        %p674 = scmp.lt.s32.totalorder %s22, 0
        %s675 = scalar_select %p674, %s22, 0
        %s676 = sadd.s32 %s675, %s673
        %s677 = smul.addr %s676, 8
        %s678 = scalar_lea.vmem %s3, %s677
      $region48: #{unet_up_forward.2} parent=39 // pred_fallthru
        _
    $region40: #{unet_up_forward.2} parent=5 // pred_fallthru
      _
  $region6: #{unet_up_forward.2} parent=0 // loop_footer
    %s14 = sadd.s32 1, %s10
  $region7: #{unet_up_forward.2} parent=0 // loop_footer_branch
    %9 = sbr.rel target = $region3
  $region8: #{unet_up_forward.2} parent=0 // loop_exit
    _

// kernel: unet_up_forward.3
$region0: #{unet_up_forward.3}
  #allocation0 [shape = 'u32[]', space=smem, size = 0x4, offset = 0x4, fixed_abs, tag = 'smem constant byte address 0x4 - core index']
  #allocation1 [shape = 'u32[144,128]{1,0:T(1,128)}', space=vmem, size = 0x12000, scoped, tag = 'internal scratch']
  %s0 = inlined_call_operand.vmem [shape: f32[8,2], index: 0, kind: input, shape index: {}]
  %s1 = inlined_call_operand.vmem [shape: f32[2,8,1024], index: 1, kind: input, shape index: {}]
  %s2 = inlined_call_operand.vmem [shape: f32[2,8,1024], index: 2, kind: input, shape index: {}]
  %s3 = inlined_call_operand.vmem [shape: f32[2,16,1024], index: 3, kind: output, shape index: {}]
  %s4 = sld [smem:[#allocation0]]
  $region45: #{unet_up_forward.3} parent=0
    _
  %s6 = ssub.s32 1, %s4
  %s7 = scalar_select 0, %s6, %s4
  loop: start=0, step=1, limit=4
  $region2: #{unet_up_forward.3} parent=0 // loop_pre_header
    _
  $region3: #{unet_up_forward.3} parent=0 // loop_header
    %s9 = sphi 0, %s13
    %p10 = scmp.ge.s32.totalorder %s9, 4
    %s16 = sphi 0, %s28
    %s17 = sphi 0, %s24
    %s18 = sphi 0, %s16
    %s19 = sphi 0, %s17
    %s20 = sphi 0, %s18
    %s21 = sphi 0, %s19
    %s29 = sphi 0, %s29
    %s31 = sphi 0, %s29
    %s32 = sphi 0, %s31
    %s46 = sphi 0, %s32
    %s54 = sphi 0, %s56
    %s57 = sphi 0, %s54
    %s58 = sphi 0, %s57
    %s74 = sphi 0, %s58
    %s82 = sphi 0, %s84
    %s85 = sphi 0, %s82
    %s86 = sphi 0, %s85
    %s102 = sphi 0, %s86
    %s110 = sphi 0, %s112
    %s113 = sphi 0, %s110
    %s114 = sphi 0, %s113
    %s130 = sphi 0, %s114
  $region4: #{unet_up_forward.3} parent=0 // loop_header_branch
    %12 = sbr.rel (%p10) target = $region8
  $region5: #{unet_up_forward.3} parent=0 // loop_body
    %s14 = ssub.s32 %s9, 1
    %s15 = ssub.s32 %s9, 2
    %s22 = sadd.s32 1, %s17
    %p23 = scmp.ge.s32.totalorder %s22, 1
    %s24 = scalar_select %p23, 0, %s22
    %s25 = sadd.s32 1, %s16
    %s26 = scalar_select %p23, %s25, %s16
    %p27 = scmp.ge.s32.totalorder %s26, 2
    %s28 = scalar_select %p27, 0, %s26
    %s30 = sadd.s32 %s29, 1
    %p33 = scmp.eq.s32.totalorder %s9, 1
    %p34 = scmp.ne.s32.totalorder %s29, %s31
    %p35 = scmp.eq.s32.totalorder %s9, 0
    %p36 = por %p34, %p35
    %p37 = scmp.ne.s32.totalorder %s29, %s31
    %p38 = scmp.eq.s32.totalorder %s14, 1
    %p39 = por %p37, %p38
    %p40 = scmp.ne.s32.totalorder %s31, %s32
    %p41 = scmp.eq.s32.totalorder %s14, 0
    %p42 = por %p40, %p41
    %p43 = scmp.ne.s32.totalorder %s31, %s32
    %p44 = scmp.eq.s32.totalorder %s15, 1
    %p45 = por %p43, %p44
    %p47 = scmp.ne.s32.totalorder %s32, %s46
    %p48 = scmp.eq.s32.totalorder %s15, 0
    %p49 = por %p47, %p48
    %s50 = ssub.s32 %s16, %s28
    %s51 = ssub.s32 %s17, %s24
    %s52 = sor.u32 %s50, %s51
    %p53 = scmp.eq.s32.totalorder %s52, 0
    %s55 = sadd.s32 %s54, 1
    %s56 = scalar_select %p53, %s54, %s55
    %p59 = pneg %p53
    %p60 = scmp.eq.s32.totalorder %s9, 1
    %p61 = por %p59, %p60
    %p62 = scmp.ne.s32.totalorder %s54, %s57
    %p63 = scmp.eq.s32.totalorder %s9, 0
    %p64 = por %p62, %p63
    %p65 = scmp.ne.s32.totalorder %s54, %s57
    %p66 = scmp.eq.s32.totalorder %s14, 1
    %p67 = por %p65, %p66
    %p68 = scmp.ne.s32.totalorder %s57, %s58
    %p69 = scmp.eq.s32.totalorder %s14, 0
    %p70 = por %p68, %p69
    %p71 = scmp.ne.s32.totalorder %s57, %s58
    %p72 = scmp.eq.s32.totalorder %s15, 1
    %p73 = por %p71, %p72
    %p75 = scmp.ne.s32.totalorder %s58, %s74
    %p76 = scmp.eq.s32.totalorder %s15, 0
    %p77 = por %p75, %p76
    %s78 = ssub.s32 %s16, %s28
    %s79 = ssub.s32 %s17, %s24
    %s80 = sor.u32 %s78, %s79
    %p81 = scmp.eq.s32.totalorder %s80, 0
    %s83 = sadd.s32 %s82, 1
    %s84 = scalar_select %p81, %s82, %s83
    %p87 = pneg %p81
    %p88 = scmp.eq.s32.totalorder %s9, 1
    %p89 = por %p87, %p88
    %p90 = scmp.ne.s32.totalorder %s82, %s85
    %p91 = scmp.eq.s32.totalorder %s9, 0
    %p92 = por %p90, %p91
    %p93 = scmp.ne.s32.totalorder %s82, %s85
    %p94 = scmp.eq.s32.totalorder %s14, 1
    %p95 = por %p93, %p94
    %p96 = scmp.ne.s32.totalorder %s85, %s86
    %p97 = scmp.eq.s32.totalorder %s14, 0
    %p98 = por %p96, %p97
    %p99 = scmp.ne.s32.totalorder %s85, %s86
    %p100 = scmp.eq.s32.totalorder %s15, 1
    %p101 = por %p99, %p100
    %p103 = scmp.ne.s32.totalorder %s86, %s102
    %p104 = scmp.eq.s32.totalorder %s15, 0
    %p105 = por %p103, %p104
    %s106 = ssub.s32 %s16, %s28
    %s107 = ssub.s32 %s17, %s24
    %s108 = sor.u32 %s106, %s107
    %p109 = scmp.eq.s32.totalorder %s108, 0
    %s111 = sadd.s32 %s110, 1
    %s112 = scalar_select %p109, %s110, %s111
    %p115 = pneg %p109
    %p116 = scmp.eq.s32.totalorder %s9, 1
    %p117 = por %p115, %p116
    %p118 = scmp.ne.s32.totalorder %s110, %s113
    %p119 = scmp.eq.s32.totalorder %s9, 0
    %p120 = por %p118, %p119
    %p121 = scmp.ne.s32.totalorder %s110, %s113
    %p122 = scmp.eq.s32.totalorder %s14, 1
    %p123 = por %p121, %p122
    %p124 = scmp.ne.s32.totalorder %s113, %s114
    %p125 = scmp.eq.s32.totalorder %s14, 0
    %p126 = por %p124, %p125
    %p127 = scmp.ne.s32.totalorder %s113, %s114
    %p128 = scmp.eq.s32.totalorder %s15, 1
    %p129 = por %p127, %p128
    %p131 = scmp.ne.s32.totalorder %s114, %s130
    %p132 = scmp.eq.s32.totalorder %s15, 0
    %p133 = por %p131, %p132
    %p134 = scmp.le.s32.totalorder 1, %s9
    %p135 = scmp.lt.s32.totalorder %s9, 3
    %p136 = pnand %p134, %p135
    %p137 = pneg %p136
    // Predicated region
    $region9: #{unet_up_forward.3} parent=5 // pred_check
      _
    $region10: #{unet_up_forward.3} parent=5 // pred_check_branch
      %139 = sbr.rel (%p136) target = $region12
    $region11: #{unet_up_forward.3} parent=5 // pred_region
      %s140 = ssub.s32 %s9, 1
      // Predicated region
      $region13: #{unet_up_forward.3} parent=11 // pred_check
        %p141 = pneg %p42
      $region14: #{unet_up_forward.3} parent=11 // pred_check_branch
        %143 = sbr.rel (%p141) target = $region16
      $region15: #{unet_up_forward.3} parent=11 // pred_region
        _
      $region16: #{unet_up_forward.3} parent=11 // pred_fallthru
        _
    $region12: #{unet_up_forward.3} parent=5 // pred_fallthru
      _
    %p144 = scmp.lt.s32.totalorder %s9, 2
    // Predicated region
    $region17: #{unet_up_forward.3} parent=5 // pred_check
      %p145 = pneg %p144
    $region18: #{unet_up_forward.3} parent=5 // pred_check_branch
      %147 = sbr.rel (%p145) target = $region20
    $region19: #{unet_up_forward.3} parent=5 // pred_region
      // Predicated region
      $region21: #{unet_up_forward.3} parent=19 // pred_check
        %p148 = pneg %p64
      $region22: #{unet_up_forward.3} parent=19 // pred_check_branch
        %150 = sbr.rel (%p148) target = $region24
      $region23: #{unet_up_forward.3} parent=19 // pred_region
        %s151 = smul.u32 8, %s17
        %p152 = scmp.lt.s32.totalorder %s16, 1
        %s153 = scalar_select %p152, %s16, 1
        %p154 = scmp.lt.s32.totalorder %s151, 7
        %s155 = scalar_select %p154, %s151, 7
        %s156 = smul.addr %s153, 8
        %s157 = sadd.s32 %s155, %s156
        %s158 = smul.addr %s157, 8
        %s159 = scalar_lea.vmem %s1, %s158
        %s160 = smul.u32 8, %s17
      $region24: #{unet_up_forward.3} parent=19 // pred_fallthru
        _
      // Predicated region
      $region25: #{unet_up_forward.3} parent=19 // pred_check
        %p161 = pneg %p92
      $region26: #{unet_up_forward.3} parent=19 // pred_check_branch
        %163 = sbr.rel (%p161) target = $region28
      $region27: #{unet_up_forward.3} parent=19 // pred_region
        %s164 = smul.u32 8, %s17
        %p165 = scmp.lt.s32.totalorder %s16, 1
        %s166 = scalar_select %p165, %s16, 1
        %p167 = scmp.lt.s32.totalorder %s164, 7
        %s168 = scalar_select %p167, %s164, 7
        %s169 = smul.addr %s166, 8
        %s170 = sadd.s32 %s168, %s169
        %s171 = smul.addr %s170, 8
        %s172 = scalar_lea.vmem %s2, %s171
        %s173 = smul.u32 8, %s17
      $region28: #{unet_up_forward.3} parent=19 // pred_fallthru
        _
    $region20: #{unet_up_forward.3} parent=5 // pred_fallthru
      _
    %p174 = scmp.le.s32.totalorder 1, %s9
    %p175 = scmp.lt.s32.totalorder %s9, 3
    %p176 = pnand %p174, %p175
    %p177 = pneg %p176
    // Predicated region
    $region29: #{unet_up_forward.3} parent=5 // pred_check
      _
    $region30: #{unet_up_forward.3} parent=5 // pred_check_branch
      %179 = sbr.rel (%p176) target = $region32
    $region31: #{unet_up_forward.3} parent=5 // pred_region
      %s180 = ssub.s32 %s9, 1
      %p181 = pneg %p42
      %p182 = pneg %p39
      %s183 = smul.u32 8, %s19
      %p184 = scmp.lt.s32.totalorder %s18, 1
      %s185 = scalar_select %p184, %s18, 1
      %p186 = scmp.lt.s32.totalorder %s183, 7
      %s187 = scalar_select %p186, %s183, 7
      %s188 = smul.addr %s185, 8
      %s189 = sadd.s32 %s187, %s188
      %s190 = smul.addr %s189, 8
      %s191 = scalar_lea.vmem %s1, %s190
      %p192 = pneg %p70
      %p193 = pneg %p67
      %s194 = smul.u32 8, %s19
      %p195 = scmp.lt.s32.totalorder %s18, 1
      %s196 = scalar_select %p195, %s18, 1
      %p197 = scmp.lt.s32.totalorder %s194, 7
      %s198 = scalar_select %p197, %s194, 7
      %s199 = smul.addr %s196, 8
      %s200 = sadd.s32 %s198, %s199
      %s201 = smul.addr %s200, 8
      %s202 = scalar_lea.vmem %s2, %s201
      %p203 = pneg %p98
      %p204 = pneg %p95
      %p205 = pneg %p126
      %p206 = pneg %p123
      %s207 = smul.u32 8, %s19
      %p208 = scmp.lt.s32.totalorder %s18, 1
      %s209 = scalar_select %p208, %s18, 1
      %p210 = scmp.lt.s32.totalorder %s207, 7
      %s211 = scalar_select %p210, %s207, 7
      %s212 = smul.addr %s209, 16
      %s213 = sadd.s32 %s211, %s212
      %s214 = smul.addr %s213, 8
      %s215 = scalar_lea.vmem %s3, %s214
      %s216 = smul.u32 8, %s19
      %p217 = scmp.lt.s32.totalorder %s18, 1
      %s218 = scalar_select %p217, %s18, 1
      %p219 = scmp.lt.s32.totalorder %s216, 7
      %s220 = scalar_select %p219, %s216, 7
      %s221 = smul.addr %s218, 8
      %s222 = sadd.s32 %s220, %s221
      %s223 = smul.addr %s222, 8
      %s224 = scalar_lea.vmem %s1, %s223
      %s225 = smul.u32 8, %s19
      %s226 = smul.u32 8, %s19
      %p227 = scmp.lt.s32.totalorder %s18, 1
      %s228 = scalar_select %p227, %s18, 1
      %p229 = scmp.lt.s32.totalorder %s226, 7
      %s230 = scalar_select %p229, %s226, 7
      %s231 = smul.addr %s228, 8
      %s232 = sadd.s32 %s230, %s231
      %s233 = smul.addr %s232, 8
      %s234 = scalar_lea.vmem %s2, %s233
      %s235 = smul.u32 8, %s19
      %s236 = smul.u32 8, %s19
      %p237 = scmp.lt.s32.totalorder %s18, 1
      %s238 = scalar_select %p237, %s18, 1
      %p239 = scmp.lt.s32.totalorder %s236, 7
      %s240 = scalar_select %p239, %s236, 7
      %s241 = smul.addr %s238, 16
      %s242 = sadd.s32 %s240, %s241
      %s243 = smul.addr %s242, 8
      %s244 = scalar_lea.vmem %s3, %s243
      %s245 = smul.u32 8, %s19
      %v246 = vld [vmem:[%s0] sm:$0xff]
      %v247 = vld [vmem:[%s224] sm:$0xff]
      %v248 = vld [vmem:[%s224 + $0x8] sm:$0xff]
      %v249 = vld [vmem:[%s224 + $0x10] sm:$0xff]
      %v250 = vld [vmem:[%s224 + $0x18] sm:$0xff]
      %v251 = vld [vmem:[%s224 + $0x20] sm:$0xff]
      %v252 = vld [vmem:[%s224 + $0x28] sm:$0xff]
      %v253 = vld [vmem:[%s224 + $0x30] sm:$0xff]
      %v254 = vld [vmem:[%s224 + $0x38] sm:$0xff]
      %256 = vset.pattern.permute.xlu0 0
      %257 = vperm.xlu0 %256, %v246
      %v258 = vpop.permute.xlu0 %257
      %v260 = vmul.f32 %v247, %v258
      %v261 = vmul.f32 %v248, %v258
      %v262 = vmul.f32 %v249, %v258
      %v263 = vmul.f32 %v250, %v258
      %v264 = vmul.f32 %v251, %v258
      %v265 = vmul.f32 %v252, %v258
      %v266 = vmul.f32 %v253, %v258
      %v267 = vmul.f32 %v254, %v258
      %268 = vset.pattern.permute.xlu0 1
      %269 = vperm.xlu0 %268, %v246
      %v270 = vpop.permute.xlu0 %269
      %v272 = vadd.f32 %v260, %v270
      %v273 = vadd.f32 %v261, %v270
      %v274 = vadd.f32 %v262, %v270
      %v275 = vadd.f32 %v263, %v270
      %v276 = vadd.f32 %v264, %v270
      %v277 = vadd.f32 %v265, %v270
      %v278 = vadd.f32 %v266, %v270
      %v279 = vadd.f32 %v267, %v270
      %v280 = vmax.f32 %v272, 0.0
      %v281 = vmax.f32 %v273, 0.0
      %v282 = vmax.f32 %v274, 0.0
      %v283 = vmax.f32 %v275, 0.0
      %v284 = vmax.f32 %v276, 0.0
      %v285 = vmax.f32 %v277, 0.0
      %v286 = vmax.f32 %v278, 0.0
      %v287 = vmax.f32 %v279, 0.0
      %288 = vst [vmem:[%s244] sm:$0xff] %v280
      %289 = vst [vmem:[%s244 + $0x8] sm:$0xff] %v281
      %290 = vst [vmem:[%s244 + $0x10] sm:$0xff] %v282
      %291 = vst [vmem:[%s244 + $0x18] sm:$0xff] %v283
      %292 = vst [vmem:[%s244 + $0x20] sm:$0xff] %v284
      %293 = vst [vmem:[%s244 + $0x28] sm:$0xff] %v285
      %294 = vst [vmem:[%s244 + $0x30] sm:$0xff] %v286
      %295 = vst [vmem:[%s244 + $0x38] sm:$0xff] %v287
      %v296 = vld [vmem:[%s234] sm:$0xff]
      %v297 = vld [vmem:[%s234 + $0x8] sm:$0xff]
      %v298 = vld [vmem:[%s234 + $0x10] sm:$0xff]
      %v299 = vld [vmem:[%s234 + $0x18] sm:$0xff]
      %v300 = vld [vmem:[%s234 + $0x20] sm:$0xff]
      %v301 = vld [vmem:[%s234 + $0x28] sm:$0xff]
      %v302 = vld [vmem:[%s234 + $0x30] sm:$0xff]
      %v303 = vld [vmem:[%s234 + $0x38] sm:$0xff]
      %304 = vst [vmem:[%s244 + $0x40] sm:$0xff] %v296
      %305 = vst [vmem:[%s244 + $0x48] sm:$0xff] %v297
      %306 = vst [vmem:[%s244 + $0x50] sm:$0xff] %v298
      %307 = vst [vmem:[%s244 + $0x58] sm:$0xff] %v299
      %308 = vst [vmem:[%s244 + $0x60] sm:$0xff] %v300
      %309 = vst [vmem:[%s244 + $0x68] sm:$0xff] %v301
      %310 = vst [vmem:[%s244 + $0x70] sm:$0xff] %v302
      %311 = vst [vmem:[%s244 + $0x78] sm:$0xff] %v303
      %s312 = smul.u32 8, %s19
      %p313 = scmp.lt.s32.totalorder %s18, 1
      %s314 = scalar_select %p313, %s18, 1
      %p315 = scmp.lt.s32.totalorder %s312, 7
      %s316 = scalar_select %p315, %s312, 7
      %s317 = smul.addr %s314, 16
      %s318 = sadd.s32 %s316, %s317
      %s319 = smul.addr %s318, 8
      %s320 = scalar_lea.vmem %s3, %s319
      // Predicated region
      $region33: #{unet_up_forward.3} parent=31 // pred_check
        %p321 = pneg %p123
      $region34: #{unet_up_forward.3} parent=31 // pred_check_branch
        %323 = sbr.rel (%p321) target = $region36
      $region35: #{unet_up_forward.3} parent=31 // pred_region
        %s324 = smul.u32 8, %s19
      $region36: #{unet_up_forward.3} parent=31 // pred_fallthru
        _
    $region32: #{unet_up_forward.3} parent=5 // pred_fallthru
      _
    %p325 = scmp.le.s32.totalorder 2, %s9
    // Predicated region
    $region37: #{unet_up_forward.3} parent=5 // pred_check
      %p326 = pneg %p325
    $region38: #{unet_up_forward.3} parent=5 // pred_check_branch
      %328 = sbr.rel (%p326) target = $region40
    $region39: #{unet_up_forward.3} parent=5 // pred_region
      %s329 = ssub.s32 %s9, 2
      // Predicated region
      $region41: #{unet_up_forward.3} parent=39 // pred_check
        %p330 = pneg %p129
      $region42: #{unet_up_forward.3} parent=39 // pred_check_branch
        %332 = sbr.rel (%p330) target = $region44
      $region43: #{unet_up_forward.3} parent=39 // pred_region
        %s333 = smul.u32 8, %s21
        %p334 = scmp.lt.s32.totalorder %s20, 1
        %s335 = scalar_select %p334, %s20, 1
        %p336 = scmp.lt.s32.totalorder %s333, 7
        %s337 = scalar_select %p336, %s333, 7
        %s338 = smul.addr %s335, 16
        %s339 = sadd.s32 %s337, %s338
        %s340 = smul.addr %s339, 8
        %s341 = scalar_lea.vmem %s3, %s340
      $region44: #{unet_up_forward.3} parent=39 // pred_fallthru
        _
    $region40: #{unet_up_forward.3} parent=5 // pred_fallthru
      _
  $region6: #{unet_up_forward.3} parent=0 // loop_footer
    %s13 = sadd.s32 1, %s9
  $region7: #{unet_up_forward.3} parent=0 // loop_footer_branch
    %8 = sbr.rel target = $region3
  $region8: #{unet_up_forward.3} parent=0 // loop_exit
    _

</llo_original>
